<compile_context>
chip_gen: v5e
topology: v5e:2x2
jax: 0.10.0
libtpu: 0.0.40
codegen_flags: <defaults>
</compile_context>

<pallas_src>
from functools import partial
from typing import NamedTuple

import jax
import jax.numpy as jnp
from jax import lax
from jax.experimental import pallas as pl
from jax.experimental.pallas import tpu as pltpu


class GuesserMeta(NamedTuple):
    num_cats: int     # C
    k1: int           # 8 + C + 1  (merged first-layer contraction width)
    k1_pad: int       # k1 rounded up to a lane-tile (128) boundary inside the slab
    hidden_dim: int   # H (encoder hidden dim)


def _guesser_kernel(slab_ref, sp_t_ref, cats_ref, henc_ref, out_ref, *,
                    num_cats, k1, k1_pad):
    C = num_cats
    N = cats_ref.shape[1]

    # Packed parameters (single VMEM slab, lane-aligned split).
    w1 = slab_ref[:, :k1]          # (64, 9+C)  = [w1_sp.T | W_cat | b1]
    w2 = slab_ref[:, k1_pad:]      # (64, H)

    # Activation stack, candidates on the lane axis.
    #   rows 0..7      : spatial.T
    #   rows 8..8+C-1  : exact one-hot of the category id (embedding gather)
    #   row  8+C       : ones (carries the b1 column of the packed weight)
    cats = cats_ref[...]                                                # (1, N) int32
    row = lax.broadcasted_iota(jnp.int32, (C + 1, N), 0)
    cat_act = jnp.logical_or(row == cats, row == C).astype(jnp.float32)  # (C+1, N)
    act = jnp.concatenate([sp_t_ref[...], cat_act], axis=0)              # (9+C, N)

    # Single merged first-layer matmul (spatial + embedding + bias) + ReLU.
    h = jnp.maximum(
        jnp.dot(w1, act, preferred_element_type=jnp.float32), 0.0)       # (64, N)

    # Encoder projection v = w2 @ h_enc (per-call), as broadcast-mul + lane reduce.
    v_col = jnp.sum(w2 * henc_ref[...], axis=1, keepdims=True)           # (64, 1)

    # scores = v.T @ h via broadcast-mul + sublane reduce (no extra MXU drain).
    scores = jnp.sum(v_col * h, axis=0, keepdims=True)                   # (1, N)

    # log-softmax over the N candidates (lane-axis reductions, lane-dense store).
    m = jnp.max(scores, axis=-1, keepdims=True)
    z = scores - m
    out_ref[...] = z - jnp.log(jnp.sum(jnp.exp(z), axis=-1, keepdims=True))


def pack_params(params):
    """One-time, parameter-only packing (hoisted out of the per-call path)."""
    emb_table, w1, b1, w2, b2 = params
    emb_table = emb_table.astype(jnp.float32)
    w1 = w1.astype(jnp.float32)
    b1 = b1.astype(jnp.float32)
    w2 = w2.astype(jnp.float32)
    del b2  # uniform score shift; exactly cancelled by log-softmax

    C = emb_table.shape[0]
    hidden = w1.shape[1]                 # 64 (fixed by the module definition)
    H = w2.shape[1]

    w_sp_t = w1[:8, :].T                                  # (64, 8)
    w_cat = (emb_table @ w1[8:, :]).T                      # (64, C)  embedding folded in
    b1_col = b1.reshape(hidden, 1)                         # (64, 1)
    w_stack = jnp.concatenate([w_sp_t, w_cat, b1_col], axis=1)   # (64, 9+C)

    k1 = int(w_stack.shape[1])
    k1_pad = ((k1 + 127) // 128) * 128                     # lane-align the w2 block
    if k1_pad > k1:
        w_stack = jnp.concatenate(
            [w_stack, jnp.zeros((hidden, k1_pad - k1), jnp.float32)], axis=1)
    slab = jnp.concatenate([w_stack, w2], axis=1)           # (64, k1_pad + H)

    return slab, GuesserMeta(num_cats=C, k1=k1, k1_pad=k1_pad, hidden_dim=H)


def guesser_forward(packed, hidden_encoder, spatial, object_categories):
    """JAX/Pallas equivalent of Guesser.forward.

    packed            : output of pack_params(params)
    hidden_encoder    : (1, 1, H)   encoder hidden state
    spatial           : (N, 8)      bbox spatial features
    object_categories : (N,)        int category ids
    returns           : (1, N)      log-softmax scores over the N objects
    """
    slab, meta = packed
    N = spatial.shape[0]

    # Per-call layout-only prep (tiny; everything else lives in the kernel).
    sp_t = spatial.astype(jnp.float32).T                           # (8, N)
    cats = object_categories.astype(jnp.int32).reshape(1, N)       # (1, N)
    # torch.cat([hidden_encoder[0]] * N)[0] == hidden_encoder[0, 0]
    henc = hidden_encoder.astype(jnp.float32).reshape(1, meta.hidden_dim)  # (1, H)

    vmem = pl.BlockSpec(memory_space=pltpu.MemorySpace.VMEM)
    kernel = partial(_guesser_kernel, num_cats=meta.num_cats,
                     k1=meta.k1, k1_pad=meta.k1_pad)

    out = pl.pallas_call(
        kernel,
        out_shape=jax.ShapeDtypeStruct((1, N), jnp.float32),
        in_specs=[vmem] * 4,
        out_specs=vmem,
    )(slab, sp_t, cats, henc)

    return out                                                      # (1, N)


def init_params(key, categories_length, object_embedding_dim, hidden_encoder_dim):
    spatial_dim = 8
    k0, k1, k2, k3, k4 = jax.random.split(key, 5)
    in_dim = object_embedding_dim + spatial_dim
    emb_table = jax.random.normal(k0, (categories_length, object_embedding_dim), jnp.float32)
    lim1 = 1.0 / jnp.sqrt(in_dim)
    w1 = jax.random.uniform(k1, (in_dim, 64), jnp.float32, -lim1, lim1)
    b1 = jax.random.uniform(k2, (1, 64), jnp.float32, -lim1, lim1)
    lim2 = 1.0 / jnp.sqrt(64.0)
    w2 = jax.random.uniform(k3, (64, hidden_encoder_dim), jnp.float32, -lim2, lim2)
    b2 = jax.random.uniform(k4, (1, hidden_encoder_dim), jnp.float32, -lim2, lim2)
    return (emb_table, w1, b1, w2, b2)


def _reference_forward(params, hidden_encoder, spatial, object_categories):
    emb_table, w1, b1, w2, b2 = params
    obj_emb = jnp.take(emb_table, object_categories, axis=0)
    mlp_in = jnp.concatenate([spatial, obj_emb], axis=1)
    h1 = jnp.maximum(mlp_in @ w1 + b1, 0.0)
    emb = h1 @ w2 + b2
    h_col = hidden_encoder[0, 0].reshape(-1, 1)
    scores = (emb @ h_col).T                      # (1, N)
    return jax.nn.log_softmax(scores, axis=-1)


if __name__ == "__main__":
    # Small, forward-implied shapes.
    hidden_encoder_dim = 32
    categories_length = 16
    object_embedding_dim = 24
    num_objects = 8

    key = jax.random.PRNGKey(0)
    kp, kh, ks, kc = jax.random.split(key, 4)

    params = init_params(kp, categories_length, object_embedding_dim, hidden_encoder_dim)
    packed = pack_params(params)

    hidden_encoder = jax.random.normal(kh, (1, 1, hidden_encoder_dim), jnp.float32)
    spatial = jax.random.uniform(ks, (num_objects, 8), jnp.float32, -1.0, 1.0)
    object_categories = jax.random.randint(kc, (num_objects,), 0, categories_length, jnp.int32)

    out = guesser_forward(packed, hidden_encoder, spatial, object_categories)
    out = jax.block_until_ready(out)

    ref = _reference_forward(params, hidden_encoder, spatial, object_categories)
    assert out.shape == (1, num_objects)
    assert jnp.allclose(out, ref, atol=1e-5, rtol=1e-5)

    print("KERNEL_OK")
</pallas_src>

<mosaic_0001>
module attributes {stable_mosaic.version = 11 : i64} {
  func.func @_guesser_kernel(%arg0: memref<64x160xf32, #tpu.memory_space<vmem>>, %arg1: memref<8x8xf32, #tpu.memory_space<vmem>>, %arg2: memref<1x8xi32, #tpu.memory_space<vmem>>, %arg3: memref<1x32xf32, #tpu.memory_space<vmem>>, %arg4: memref<1x8xf32, #tpu.memory_space<vmem>>) attributes {dimension_semantics = [], scalar_prefetch = 0 : i64, scratch_operands = 0 : i64, tpu.core_type = #tpu.core_type<tc>} {
    %c0 = arith.constant 0 : index
    %c0_0 = arith.constant 0 : index
    %0 = vector.load %arg0[%c0, %c0_0] : memref<64x160xf32, #tpu.memory_space<vmem>>, vector<64x25xf32>
    %c0_1 = arith.constant 0 : index
    %c128 = arith.constant 128 : index
    %1 = vector.load %arg0[%c0_1, %c128] : memref<64x160xf32, #tpu.memory_space<vmem>>, vector<64x32xf32>
    %c0_2 = arith.constant 0 : index
    %c0_3 = arith.constant 0 : index
    %2 = vector.load %arg2[%c0_2, %c0_3] : memref<1x8xi32, #tpu.memory_space<vmem>>, vector<1x8xi32>
    %3 = tpu.iota {dimensions = array<i32: 0>} : vector<17x8xi32>
    %4 = vector.broadcast %2 : vector<1x8xi32> to vector<17x8xi32>
    %5 = arith.cmpi eq, %3, %4 : vector<17x8xi32>
    %c16_i32 = arith.constant 16 : i32
    %6 = vector.broadcast %c16_i32 : i32 to vector<17x8xi32>
    %7 = arith.cmpi eq, %3, %6 : vector<17x8xi32>
    %8 = arith.ori %5, %7 : vector<17x8xi1>
    %9 = arith.extui %8 : vector<17x8xi1> to vector<17x8xi32>
    %10 = arith.sitofp %9 : vector<17x8xi32> to vector<17x8xf32>
    %c0_4 = arith.constant 0 : index
    %c0_5 = arith.constant 0 : index
    %11 = vector.load %arg1[%c0_4, %c0_5] : memref<8x8xf32, #tpu.memory_space<vmem>>, vector<8x8xf32>
    %12 = tpu.concatenate %11, %10 in 0 : vector<8x8xf32>, vector<17x8xf32> -> vector<25x8xf32>
    %cst = arith.constant dense<0.000000e+00> : vector<64x8xf32>
    %13 = tpu.matmul %0, %12, %cst {dimension_numbers = #tpu.dot_dimension_numbers<[1], [0], [0], [1], [0, 0, 1, 1], [], []>} : vector<64x25xf32>, vector<25x8xf32>, vector<64x8xf32> -> vector<64x8xf32>
    %cst_6 = arith.constant 0.000000e+00 : f32
    %14 = vector.broadcast %cst_6 : f32 to vector<64x8xf32>
    %15 = arith.maximumf %13, %14 : vector<64x8xf32>
    %c0_7 = arith.constant 0 : index
    %c0_8 = arith.constant 0 : index
    %16 = vector.load %arg3[%c0_7, %c0_8] : memref<1x32xf32, #tpu.memory_space<vmem>>, vector<1x32xf32>
    %17 = vector.broadcast %16 : vector<1x32xf32> to vector<64x32xf32>
    %18 = arith.mulf %1, %17 : vector<64x32xf32>
    %cst_9 = arith.constant dense<0.000000e+00> : vector<64xf32>
    %19 = vector.multi_reduction <add>, %18, %cst_9 [1] : vector<64x32xf32> to vector<64xf32>
    %20 = vector.shape_cast %19 : vector<64xf32> to vector<64x1xf32>
    %21 = vector.broadcast %20 : vector<64x1xf32> to vector<64x8xf32>
    %22 = arith.mulf %21, %15 : vector<64x8xf32>
    %cst_10 = arith.constant dense<0.000000e+00> : vector<8xf32>
    %23 = vector.multi_reduction <add>, %22, %cst_10 [0] : vector<64x8xf32> to vector<8xf32>
    %24 = vector.shape_cast %23 : vector<8xf32> to vector<1x8xf32>
    %cst_11 = arith.constant dense<0xFF800000> : vector<1xf32>
    %25 = vector.multi_reduction <maximumf>, %24, %cst_11 [1] : vector<1x8xf32> to vector<1xf32>
    %26 = vector.shape_cast %25 : vector<1xf32> to vector<1x1xf32>
    %27 = vector.broadcast %26 : vector<1x1xf32> to vector<1x8xf32>
    %28 = arith.subf %24, %27 : vector<1x8xf32>
    %29 = math.exp %28 : vector<1x8xf32>
    %cst_12 = arith.constant dense<0.000000e+00> : vector<1xf32>
    %30 = vector.multi_reduction <add>, %29, %cst_12 [1] : vector<1x8xf32> to vector<1xf32>
    %31 = vector.shape_cast %30 : vector<1xf32> to vector<1x1xf32>
    %32 = math.log %31 : vector<1x1xf32>
    %33 = vector.broadcast %32 : vector<1x1xf32> to vector<1x8xf32>
    %34 = arith.subf %28, %33 : vector<1x8xf32>
    %c0_13 = arith.constant 0 : index
    %c0_14 = arith.constant 0 : index
    %35 = vector.load %arg4[%c0_13, %c0_14] : memref<1x8xf32, #tpu.memory_space<vmem>>, vector<1x8xf32>
    tpu.vector_store %arg4[%c0_13, %c0_14], %34 {strides = array<i32>} : memref<1x8xf32, #tpu.memory_space<vmem>>, vector<1x8xf32>,
    return
  }
}

</mosaic_0001>

<llo_original>
// kernel: tpu_custom_call.1
$region0: #{tpu_custom_call.1}
  #allocation0 [shape = 'u32[]', space=smem, size = 0x4, offset = 0x4, fixed_abs, tag = 'smem constant byte address 0x4 - core index']
  #allocation1 [shape = 'u32[72,128]{1,0:T(1,128)}', space=vmem, size = 0x9000, scoped, tag = 'internal scratch']
  %s0 = inlined_call_operand.hbm [shape: f32[64,160], index: 0, kind: input, shape index: {}]
  %s1 = inlined_call_operand.hbm [shape: f32[8,8], index: 1, kind: input, shape index: {}]
  %s2 = inlined_call_operand.vmem [shape: s32[1,8], index: 2, kind: input, shape index: {}]
  %s3 = inlined_call_operand.vmem [shape: f32[1,32], index: 3, kind: input, shape index: {}]
  %s4 = inlined_call_operand.hbm [shape: f32[1,8], index: 4, kind: output, shape index: {}]
  %s5 = sld [smem:[#allocation0]]
  $region34: #{tpu_custom_call.1} parent=0
    _
  %s7 = ssub.s32 1, %s5
  %s8 = scalar_select 0, %s7, %s5
  $region1: #{tpu_custom_call.1} parent=0
    #allocation2 [shape = 'u8[65536]{0}', space=vmem, size = 0x10000, scoped, tag = 'input window, operand 0, single buffered']
    #allocation3 [shape = 's32[1]{0}', space=sflag, size = 0x4, scoped, tag = 'scoped memory for tpu_custom_call.1']
    #allocation4 [shape = 's32[1]{0}', space=sflag, size = 0x4, scoped, tag = 'scoped memory for tpu_custom_call.1']
    #allocation5 [shape = 'u8[4096]{0}', space=vmem, size = 0x1000, scoped, tag = 'input window, operand 1, single buffered']
    #allocation6 [shape = 's32[1]{0}', space=sflag, size = 0x4, scoped, tag = 'scoped memory for tpu_custom_call.1']
    #allocation7 [shape = 'u8[512]{0}', space=vmem, size = 0x400, scoped, tag = 'output window, operand 0, single buffered']
    %9 = vsyncpa [#allocation3], 0
    %10 = vsyncpa [#allocation6], 0
    %11 = vsyncpa [#allocation4], 0
    // Predicated region
    $region2: #{tpu_custom_call.1} parent=1 // pred_check
      _
    $region3: #{tpu_custom_call.1} parent=1 // pred_check_branch
      %13 = sbr.rel (0) target = $region5
    $region4: #{tpu_custom_call.1} parent=1 // pred_region
      %15 = vsyncadd [#allocation3], 0
      %s16 = sshll.u32 %s0, 4
      %s17 = int_to_ptr.hbm [resolvable:$true] %s16
      %s18 = sshll.u32 [#allocation2], 4
      %s19 = int_to_ptr.vmem [resolvable:$true] %s18
      %24 = dma.hbm_to_vmem [thread:$0]  %s17, 2048, %s19, [#allocation3], 256, 256, 16
    $region5: #{tpu_custom_call.1} parent=1 // pred_fallthru
      _
    // Predicated region
    $region6: #{tpu_custom_call.1} parent=1 // pred_check
      _
    $region7: #{tpu_custom_call.1} parent=1 // pred_check_branch
      %26 = sbr.rel (0) target = $region9
    $region8: #{tpu_custom_call.1} parent=1 // pred_region
      %28 = vsyncadd [#allocation6], 0
      %s30 = sshll.u32 %s1, 4
      %s31 = int_to_ptr.hbm [resolvable:$true] %s30
      %s32 = sshll.u32 [#allocation5], 4
      %s33 = int_to_ptr.vmem [resolvable:$true] %s32
      %35 = dma.hbm_to_vmem [thread:$0]  %s31, 128, %s33, [#allocation6]
    $region9: #{tpu_custom_call.1} parent=1 // pred_fallthru
      _
    // Predicated region
    $region10: #{tpu_custom_call.1} parent=1 // pred_check
      _
    $region11: #{tpu_custom_call.1} parent=1 // pred_check_branch
      %37 = sbr.rel (0) target = $region13
    $region12: #{tpu_custom_call.1} parent=1 // pred_region
      _
    $region13: #{tpu_custom_call.1} parent=1 // pred_fallthru
      _
    // Predicated region
    $region14: #{tpu_custom_call.1} parent=1 // pred_check
      _
    $region15: #{tpu_custom_call.1} parent=1 // pred_check_branch
      %39 = sbr.rel (0) target = $region17
    $region16: #{tpu_custom_call.1} parent=1 // pred_region
      _
    $region17: #{tpu_custom_call.1} parent=1 // pred_fallthru
      _
    // Predicated region
    $region18: #{tpu_custom_call.1} parent=1 // pred_check
      _
    $region19: #{tpu_custom_call.1} parent=1 // pred_check_branch
      %41 = sbr.rel (0) target = $region21
    $region20: #{tpu_custom_call.1} parent=1 // pred_region
      %43 = dma.done [#allocation3], 2048
    $region21: #{tpu_custom_call.1} parent=1 // pred_fallthru
      _
    // Predicated region
    $region22: #{tpu_custom_call.1} parent=1 // pred_check
      _
    $region23: #{tpu_custom_call.1} parent=1 // pred_check_branch
      %45 = sbr.rel (0) target = $region25
    $region24: #{tpu_custom_call.1} parent=1 // pred_region
      %47 = dma.done [#allocation6], 128
    $region25: #{tpu_custom_call.1} parent=1 // pred_fallthru
      _
    %v48 = vld [vmem:[#allocation2] sm:$0xff]
    %v49 = vld [vmem:[#allocation2 + $0x10] sm:$0xff]
    %v50 = vld [vmem:[#allocation2 + $0x20] sm:$0xff]
    %v51 = vld [vmem:[#allocation2 + $0x30] sm:$0xff]
    %v52 = vld [vmem:[#allocation2 + $0x40] sm:$0xff]
    %v53 = vld [vmem:[#allocation2 + $0x50] sm:$0xff]
    %v54 = vld [vmem:[#allocation2 + $0x60] sm:$0xff]
    %v55 = vld [vmem:[#allocation2 + $0x70] sm:$0xff]
    %v56 = vld [vmem:[#allocation2 + $0x8] sm:$0xff]
    %v57 = vld [vmem:[#allocation2 + $0x18] sm:$0xff]
    %v58 = vld [vmem:[#allocation2 + $0x28] sm:$0xff]
    %v59 = vld [vmem:[#allocation2 + $0x38] sm:$0xff]
    %v60 = vld [vmem:[#allocation2 + $0x48] sm:$0xff]
    %v61 = vld [vmem:[#allocation2 + $0x58] sm:$0xff]
    %v62 = vld [vmem:[#allocation2 + $0x68] sm:$0xff]
    %v63 = vld [vmem:[#allocation2 + $0x78] sm:$0xff]
    %v64 = vld [vmem:[%s2] sm:$0x1]
    %v65 = vlaneseq
    %v66 = vshrl.u32 %v65, 7
    %v67 = vadd.s32 %v66, 8
    %v68 = vadd.s32 %v66, 16
    %v69 = vperm.slane %v64, 0
    %vm70 = vcmp.eq.s32.totalorder %v66, %v69
    %vm71 = vcmp.eq.s32.totalorder %v67, %v69
    %vm72 = vcmp.eq.s32.totalorder %v68, %v69
    %vm73 = vcmp.eq.s32.totalorder %v66, 16
    %vm74 = vcmp.eq.s32.totalorder %v67, 16
    %vm75 = vcmp.eq.s32.totalorder %v68, 16
    %vm76 = vmor %vm70, %vm73
    %vm77 = vmor %vm71, %vm74
    %vm78 = vmor %vm72, %vm75
    %v79 = vsel %vm76, 1, 0
    %v80 = vsel %vm77, 1, 0
    %v81 = vsel %vm78, 1, 0
    %v82 = vcvt.s32.f32 %v79
    %v83 = vcvt.s32.f32 %v80
    %v84 = vcvt.s32.f32 %v81
    %v85 = vld [vmem:[#allocation5] sm:$0xff]
    %vm86 = vcmask 203776
    %v88 = vsel %vm86, %v48, 0
    %v91 = vsel %vm86, %v49, 0
    %v94 = vsel %vm86, %v50, 0
    %v97 = vsel %vm86, %v51, 0
    %v100 = vsel %vm86, %v52, 0
    %v103 = vsel %vm86, %v53, 0
    %v106 = vsel %vm86, %v54, 0
    %v109 = vsel %vm86, %v55, 0
    %vm111 = vcmask 1040384
    %v113 = vsel %vm111, %v84, 0
    %115 = vmatpush.msra.mxu0 0.0
    %116 = vmatpush.msra.mxu0 0.0
    %117 = vmatpush.msra.mxu0 0.0
    %118 = vmatpush.msra.mxu0 0.0
    %119 = vmatpush.msra.mxu0 0.0
    %120 = vmatpush.msra.mxu0 0.0
    %121 = vmatpush.msra.mxu0 0.0
    %122 = vmatpush.msra.mxu0 0.0
    %123 = vmatpush.msra.mxu0 0.0
    %124 = vmatpush.msra.mxu0 0.0
    %125 = vmatpush.msra.mxu0 0.0
    %126 = vmatpush.msra.mxu0 0.0
    %127 = vmatpush.msra.mxu0 %v113
    %128 = vmatpush.msra.mxu0 %v83
    %129 = vmatpush.msra.mxu0 %v82
    %130 = vmatpush.msra.mxu0 %v85
    %131 = vmatmul.f32.gmra.mxu0 %v88
    %v132 = vpop.f32.mrf.mxu0
    %v133 = vadd.f32 0.0, %v132
    %134 = vmatmul.f32.gmra.mxu0 %v91
    %v135 = vpop.f32.mrf.mxu0
    %v136 = vadd.f32 0.0, %v135
    %137 = vmatmul.f32.gmra.mxu0 %v94
    %v138 = vpop.f32.mrf.mxu0
    %v139 = vadd.f32 0.0, %v138
    %140 = vmatmul.f32.gmra.mxu0 %v97
    %v141 = vpop.f32.mrf.mxu0
    %v142 = vadd.f32 0.0, %v141
    %143 = vmatmul.f32.gmra.mxu0 %v100
    %v144 = vpop.f32.mrf.mxu0
    %v145 = vadd.f32 0.0, %v144
    %146 = vmatmul.f32.gmra.mxu0 %v103
    %v147 = vpop.f32.mrf.mxu0
    %v148 = vadd.f32 0.0, %v147
    %149 = vmatmul.f32.gmra.mxu0 %v106
    %v150 = vpop.f32.mrf.mxu0
    %v151 = vadd.f32 0.0, %v150
    %152 = vmatmul.f32.gmra.mxu0 %v109
    %v153 = vpop.f32.mrf.mxu0
    %v154 = vadd.f32 0.0, %v153
    %155 = vdwg.mxu0
    %v156 = vmax.f32 %v133, 0.0
    %v157 = vmax.f32 %v136, 0.0
    %v158 = vmax.f32 %v139, 0.0
    %v159 = vmax.f32 %v142, 0.0
    %v160 = vmax.f32 %v145, 0.0
    %v161 = vmax.f32 %v148, 0.0
    %v162 = vmax.f32 %v151, 0.0
    %v163 = vmax.f32 %v154, 0.0
    %v164 = vld [vmem:[%s3] sm:$0x1]
    %v166 = vperm.slane %v164, 0
    %v168 = vmul.f32 %v56, %v166
    %v169 = vmul.f32 %v57, %v166
    %v170 = vmul.f32 %v58, %v166
    %v171 = vmul.f32 %v59, %v166
    %v172 = vmul.f32 %v60, %v166
    %v173 = vmul.f32 %v61, %v166
    %v174 = vmul.f32 %v62, %v166
    %v175 = vmul.f32 %v63, %v166
    %vm176 = vcmask 261120
    %v177 = vsel %vm176, %v168, 0.0
    %178 = vadd.xlane.f32.xlu0 %v177
    %v179 = vpop.xlane.xlu0 %178
    %v180 = vsel %vm176, %v169, 0.0
    %181 = vadd.xlane.f32.xlu0 %v180
    %v182 = vpop.xlane.xlu0 %181
    %v183 = vsel %vm176, %v170, 0.0
    %184 = vadd.xlane.f32.xlu0 %v183
    %v185 = vpop.xlane.xlu0 %184
    %v186 = vsel %vm176, %v171, 0.0
    %187 = vadd.xlane.f32.xlu0 %v186
    %v188 = vpop.xlane.xlu0 %187
    %v189 = vsel %vm176, %v172, 0.0
    %190 = vadd.xlane.f32.xlu0 %v189
    %v191 = vpop.xlane.xlu0 %190
    %v192 = vsel %vm176, %v173, 0.0
    %193 = vadd.xlane.f32.xlu0 %v192
    %v194 = vpop.xlane.xlu0 %193
    %v195 = vsel %vm176, %v174, 0.0
    %196 = vadd.xlane.f32.xlu0 %v195
    %v197 = vpop.xlane.xlu0 %196
    %v198 = vsel %vm176, %v175, 0.0
    %199 = vadd.xlane.f32.xlu0 %v198
    %v200 = vpop.xlane.xlu0 %199
    %v201 = vmul.f32 %v179, %v156
    %v202 = vmul.f32 %v182, %v157
    %v203 = vmul.f32 %v185, %v158
    %v204 = vmul.f32 %v188, %v159
    %v205 = vmul.f32 %v191, %v160
    %v206 = vmul.f32 %v194, %v161
    %v207 = vmul.f32 %v197, %v162
    %v208 = vmul.f32 %v200, %v163
    %vm209 = vcmask 64512
    %v210 = vsel %vm209, %v201, 0.0
    %v211 = vsel %vm209, %v202, 0.0
    %v212 = vadd.f32 %v210, %v211
    %v213 = vsel %vm209, %v203, 0.0
    %v214 = vadd.f32 %v212, %v213
    %v215 = vsel %vm209, %v204, 0.0
    %v216 = vadd.f32 %v214, %v215
    %v217 = vsel %vm209, %v205, 0.0
    %v218 = vadd.f32 %v216, %v217
    %v219 = vsel %vm209, %v206, 0.0
    %v220 = vadd.f32 %v218, %v219
    %v221 = vsel %vm209, %v207, 0.0
    %v222 = vadd.f32 %v220, %v221
    %v223 = vsel %vm209, %v208, 0.0
    %v224 = vadd.f32 %v222, %v223
    %v225 = vrot.slane %v224, 4
    %v226 = vadd.f32 %v224, %v225
    %v227 = vrot.slane %v226, 2
    %v228 = vadd.f32 %v226, %v227
    %v229 = vrot.slane %v228, 1
    %v230 = vadd.f32 %v228, %v229
    %v231 = vsel %vm209, %v230, -inf
    %232 = vmax.xlane.f32.xlu0 %v231
    %v233 = vpop.xlane.xlu0 %232
    %v234 = vsub.f32 %v230, %v233
    %v235 = vmul.f32 %v234, 1.442695
    %v236 = vpow.pop %v235
    %v237 = vsel %vm209, %v236, 0.0
    %238 = vadd.xlane.f32.xlu0 %v237
    %v239 = vpop.xlane.xlu0 %238
    %v240 = vlog2.pop %v239
    %v241 = vmul.f32 %v240, 0.6931472
    %v242 = vsub.f32 %v234, %v241
    %vm243 = vcmask 57344
    %244 = vst.msk [vmem:[#allocation7] sm:$0x1] %vm243, %v242
    // Predicated region
    $region26: #{tpu_custom_call.1} parent=1 // pred_check
      _
    $region27: #{tpu_custom_call.1} parent=1 // pred_check_branch
      %246 = sbr.rel (0) target = $region29
    $region28: #{tpu_custom_call.1} parent=1 // pred_region
      %248 = vsyncadd [#allocation4], 0
      %s250 = sshll.u32 [#allocation7], 4
      %s251 = int_to_ptr.vmem [resolvable:$true] %s250
      %s252 = sshll.u32 %s4, 4
      %s253 = int_to_ptr.hbm [resolvable:$true] %s252
      %255 = dma.vmem_to_hbm [thread:$0]  %s251, 16, %s253, [#allocation4]
    $region29: #{tpu_custom_call.1} parent=1 // pred_fallthru
      _
    // Predicated region
    $region30: #{tpu_custom_call.1} parent=1 // pred_check
      _
    $region31: #{tpu_custom_call.1} parent=1 // pred_check_branch
      %257 = sbr.rel (0) target = $region33
    $region32: #{tpu_custom_call.1} parent=1 // pred_region
      %259 = dma.done [#allocation4], 16
    $region33: #{tpu_custom_call.1} parent=1 // pred_fallthru
      _
    %260 = vsyncpa [#allocation3], 1
    %261 = vsyncpa [#allocation6], 1
    %262 = vsyncpa [#allocation4], 1

</llo_original>
